<compile_context>
chip_gen: v7x
topology: tpu7x:2x2x1
jax: 0.10.0
libtpu: 0.0.40
codegen_flags: <defaults>
</compile_context>

<pallas_src>
import jax
import jax.numpy as jnp
from jax.experimental import pallas as pl
from jax.experimental.pallas import tpu as pltpu

IGNORE_INDEX = -100
BETA = 0.1


def _round_up(x, m):
    return ((x + m - 1) // m) * m


def _mcts_loss_kernel(hm_ref, hr_ref, wm_ref, bm_ref, wr_ref, br_ref,
                      tgt_ref, rowmask_ref, kl_ref, ce_ref, cnt_ref):
    # ---- init accumulators (outputs are VMEM-resident across the grid) ----
    @pl.when(pl.program_id(0) == 0)
    def _():
        kl_ref[...] = jnp.zeros_like(kl_ref)
        ce_ref[...] = jnp.zeros_like(ce_ref)
        cnt_ref[...] = jnp.zeros_like(cnt_ref)

    # ---- lm_head matmuls: bf16 inputs on the MXU, f32 accumulation --------
    logits = jnp.dot(hm_ref[...], wm_ref[...],
                     preferred_element_type=jnp.float32) + bm_ref[...]      # (T, V) f32
    ref_logits = jnp.dot(hr_ref[...], wr_ref[...],
                         preferred_element_type=jnp.float32) + br_ref[...]  # (T, V) f32

    # ---- p = log_softmax(logits) over the vocab ---------------------------
    m = jnp.max(logits, axis=-1, keepdims=True)                 # (T, 1)
    z = logits - m
    lse = jnp.log(jnp.sum(jnp.exp(z), axis=-1, keepdims=True))  # (T, 1)
    p = z - lse                                                 # (T, V) log-probs

    # ---- q = softmax(ref_logits); log_q analytically (no (T,V) log) -------
    rm = jnp.max(ref_logits, axis=-1, keepdims=True)
    rz = ref_logits - rm
    re = jnp.exp(rz)
    rs = jnp.sum(re, axis=-1, keepdims=True)                    # (T, 1)
    q = re * pl.reciprocal(rs, approx=True)                     # EUP recip + VPU mul
    log_q = rz - jnp.log(rs)                                    # finite even if q underflows

    # ---- F.kl_div(p, q) partial sum; padded rows masked out ----------------
    row_mask = rowmask_ref[...]                                 # (T, 1) f32 1/0
    kl_row = jnp.sum(q * (log_q - p), axis=1, keepdims=True) * row_mask
    kl_ref[...] += jnp.sum(kl_row, axis=0, keepdims=True)       # (1, 1)

    # ---- causal-LM cross entropy on pre-shifted targets (ignore -100) ------
    tgt = tgt_ref[...]                                          # (T, 1) int32
    valid = tgt != IGNORE_INDEX
    safe = jnp.where(valid, tgt, 0)
    vocab_ids = jax.lax.broadcasted_iota(jnp.int32, logits.shape, 1)        # (T, V)
    tok_logit = jnp.sum(jnp.where(vocab_ids == safe, logits, 0.0),
                        axis=1, keepdims=True)                              # (T, 1)
    tok_logp = tok_logit - (m + lse)
    nll = jnp.where(valid, -tok_logp, 0.0)
    ce_ref[...] += jnp.sum(nll, axis=0, keepdims=True)                      # (1, 1)
    cnt_ref[...] += jnp.sum(valid.astype(jnp.float32), axis=0, keepdims=True)


def mcts_loss(params, input_ids, attention_mask, labels, reward_diff,
              beta=BETA, tile_n=256):
    # TODO(synk): attention_mask is an argument of the opaque HF model; the
    #             synthetic embedding+lm_head stand-in does not use it.
    del attention_mask
    B, S = input_ids.shape
    H = params["emb_m"].shape[1]
    V = params["w_m"].shape[1]
    N = B * S

    # glue: embedding lookup (stand-in model body), flatten tokens, bf16 cast
    h_m = params["emb_m"][input_ids].reshape(N, H).astype(jnp.bfloat16)
    h_r = params["emb_r"][input_ids].reshape(N, H).astype(jnp.bfloat16)

    # causal-LM shift: logits at position s predict labels at s+1
    shifted = jnp.concatenate(
        [labels[:, 1:], jnp.full((B, 1), IGNORE_INDEX, labels.dtype)], axis=1)
    tgt = shifted.reshape(N, 1).astype(jnp.int32)

    # tile / pad the token axis (tile multiple of 16 for bf16 sublane packing)
    tn = min(tile_n, _round_up(N, 16))
    n_pad = _round_up(N, tn)
    pad = n_pad - N
    if pad:
        h_m = jnp.pad(h_m, ((0, pad), (0, 0)))
        h_r = jnp.pad(h_r, ((0, pad), (0, 0)))
        tgt = jnp.pad(tgt, ((0, pad), (0, 0)), constant_values=IGNORE_INDEX)
    row_mask = (jnp.arange(n_pad) < N).astype(jnp.float32).reshape(n_pad, 1)

    w_m = params["w_m"].astype(jnp.bfloat16)
    w_r = params["w_r"].astype(jnp.bfloat16)
    b_m = params["b_m"].reshape(1, V).astype(jnp.float32)
    b_r = params["b_r"].reshape(1, V).astype(jnp.float32)

    grid = (n_pad // tn,)
    row_spec = lambda shape: pl.BlockSpec(shape, lambda i: (i, 0))    # streamed per tile
    const_spec = lambda shape: pl.BlockSpec(shape, lambda i: (0, 0))  # resident weights
    out_spec = pl.BlockSpec((1, 1), lambda i: (0, 0))                 # accumulator

    kl_sum, ce_sum, cnt = pl.pallas_call(
        _mcts_loss_kernel,
        out_shape=(jax.ShapeDtypeStruct((1, 1), jnp.float32),) * 3,
        grid=grid,
        in_specs=[
            row_spec((tn, H)),      # h_m   (bf16)
            row_spec((tn, H)),      # h_r   (bf16)
            const_spec((H, V)),     # w_m   (bf16, resident)
            const_spec((1, V)),     # b_m   (f32,  resident)
            const_spec((H, V)),     # w_r   (bf16, resident)
            const_spec((1, V)),     # b_r   (f32,  resident)
            row_spec((tn, 1)),      # tgt   (int32)
            row_spec((tn, 1)),      # row_mask (f32)
        ],
        out_specs=(out_spec,) * 3,
        compiler_params=pltpu.CompilerParams(
            # Accumulating output block across the N axis -> "arbitrary".
            # TODO(synk): for v7x megacore, emit per-tile partials on a
            #             "parallel" axis and reduce in the wrapper.
            dimension_semantics=("arbitrary",),
            vmem_limit_bytes=48 * 1024 * 1024,
        ),
    )(h_m, h_r, w_m, b_m, w_r, b_r, tgt, row_mask)

    cnt_safe = jnp.maximum(cnt[0, 0], 1.0)     # guard: all labels ignored
    loss_ce = ce_sum[0, 0] / cnt_safe          # outputs.loss (mean over valid tokens)
    kl_div = kl_sum[0, 0] / B                  # F.kl_div(..., reduction='batchmean')
    return -(reward_diff * loss_ce - beta * kl_div)


def mcts_loss_reference(params, input_ids, attention_mask, labels, reward_diff,
                        beta=BETA):
    del attention_mask
    B, _ = input_ids.shape
    h_m = params["emb_m"][input_ids]
    h_r = params["emb_r"][input_ids]
    logits = h_m @ params["w_m"] + params["b_m"]
    ref_logits = h_r @ params["w_r"] + params["b_r"]

    shift_logits = logits[:, :-1, :]
    shift_labels = labels[:, 1:]
    valid = shift_labels != IGNORE_INDEX
    logp = jax.nn.log_softmax(shift_logits, axis=-1)
    safe = jnp.where(valid, shift_labels, 0)
    tok = jnp.take_along_axis(logp, safe[..., None], axis=-1)[..., 0]
    loss_ce = -jnp.sum(jnp.where(valid, tok, 0.0)) / jnp.sum(valid)

    p = jax.nn.log_softmax(logits, axis=-1)
    q = jax.nn.softmax(ref_logits, axis=-1)
    kl_div = jnp.sum(q * (jnp.log(q) - p)) / B
    return -(reward_diff * loss_ce - beta * kl_div)


if __name__ == "__main__":
    # Small shapes; S chosen so N=80 does NOT divide the tile (exercises the
    # padded-row mask) and tile_n=32 gives a multi-step grid (exercises the
    # accumulator init / += path).
    B, S, H, V = 2, 40, 32, 128

    key = jax.random.PRNGKey(0)
    k = jax.random.split(key, 8)
    params = {
        "emb_m": jax.random.normal(k[0], (V, H), jnp.float32) * 0.5,
        "emb_r": jax.random.normal(k[1], (V, H), jnp.float32) * 0.5,
        "w_m": jax.random.normal(k[2], (H, V), jnp.float32) * 0.2,
        "b_m": jax.random.normal(k[3], (V,), jnp.float32) * 0.1,
        "w_r": jax.random.normal(k[4], (H, V), jnp.float32) * 0.2,
        "b_r": jax.random.normal(k[5], (V,), jnp.float32) * 0.1,
    }

    input_ids = jax.random.randint(k[6], (B, S), 0, V, jnp.int32)
    attention_mask = jnp.ones((B, S), jnp.int32)
    labels = input_ids.at[:, :2].set(IGNORE_INDEX)   # mask "prompt" tokens
    reward_diff = jnp.float32(0.7)

    loss = mcts_loss(params, input_ids, attention_mask, labels, reward_diff,
                     tile_n=32)
    loss = jax.block_until_ready(loss)

    ref = mcts_loss_reference(params, input_ids, attention_mask, labels,
                              reward_diff)
    # Tolerance accounts for bf16 matmul inputs vs the f32 reference.
    assert jnp.allclose(loss, ref, rtol=2e-2, atol=2e-2), (loss, ref)

    print("KERNEL_OK")
</pallas_src>

<mosaic_0001>
module attributes {stable_mosaic.version = 11 : i64} {
  func.func @_mcts_loss_kernel(%arg0: i32, %arg1: memref<32x32xbf16, #tpu.memory_space<vmem>>, %arg2: memref<32x32xbf16, #tpu.memory_space<vmem>>, %arg3: memref<32x128xbf16, #tpu.memory_space<vmem>>, %arg4: memref<1x128xf32, #tpu.memory_space<vmem>>, %arg5: memref<32x128xbf16, #tpu.memory_space<vmem>>, %arg6: memref<1x128xf32, #tpu.memory_space<vmem>>, %arg7: memref<32x1xi32, #tpu.memory_space<vmem>>, %arg8: memref<32x1xf32, #tpu.memory_space<vmem>>, %arg9: memref<1x1xf32, #tpu.memory_space<vmem>>, %arg10: memref<1x1xf32, #tpu.memory_space<vmem>>, %arg11: memref<1x1xf32, #tpu.memory_space<vmem>>) attributes {dimension_semantics = [#tpu.dimension_semantics<arbitrary>], iteration_bounds = array<i64: 3>, scalar_prefetch = 0 : i64, scratch_operands = 0 : i64, tpu.core_type = #tpu.core_type<tc>, window_params = [{transform_indices = @transform_0, window_bounds = array<i64: 32, 32>}, {transform_indices = @transform_1, window_bounds = array<i64: 32, 32>}, {pipeline_mode = #tpu.pipeline_mode<synchronous>, transform_indices = @transform_2, window_bounds = array<i64: 32, 128>}, {pipeline_mode = #tpu.pipeline_mode<synchronous>, transform_indices = @transform_3, window_bounds = array<i64: 1, 128>}, {pipeline_mode = #tpu.pipeline_mode<synchronous>, transform_indices = @transform_4, window_bounds = array<i64: 32, 128>}, {pipeline_mode = #tpu.pipeline_mode<synchronous>, transform_indices = @transform_5, window_bounds = array<i64: 1, 128>}, {transform_indices = @transform_6, window_bounds = array<i64: 32, 1>}, {transform_indices = @transform_7, window_bounds = array<i64: 32, 1>}, {pipeline_mode = #tpu.pipeline_mode<synchronous>, transform_indices = @transform_8, window_bounds = array<i64: 1, 1>}, {pipeline_mode = #tpu.pipeline_mode<synchronous>, transform_indices = @transform_9, window_bounds = array<i64: 1, 1>}, {pipeline_mode = #tpu.pipeline_mode<synchronous>, transform_indices = @transform_10, window_bounds = array<i64: 1, 1>}]} {
    %c0_i32 = arith.constant 0 : i32
    %0 = arith.cmpi eq, %arg0, %c0_i32 : i32
    %1 = arith.extui %0 : i1 to i32
    %c0_i32_0 = arith.constant 0 : i32
    %2 = arith.cmpi ne, %1, %c0_i32_0 : i32
    scf.if %2 {
      %cst_42 = arith.constant 0.000000e+00 : f32
      %79 = vector.broadcast %cst_42 : f32 to vector<1x1xf32>
      %c0_43 = arith.constant 0 : index
      %c0_44 = arith.constant 0 : index
      %80 = vector.load %arg9[%c0_43, %c0_44] : memref<1x1xf32, #tpu.memory_space<vmem>>, vector<1x1xf32>
      tpu.vector_store %arg9[%c0_43, %c0_44], %79 {strides = array<i32>} : memref<1x1xf32, #tpu.memory_space<vmem>>, vector<1x1xf32>,
      %cst_45 = arith.constant 0.000000e+00 : f32
      %81 = vector.broadcast %cst_45 : f32 to vector<1x1xf32>
      %c0_46 = arith.constant 0 : index
      %c0_47 = arith.constant 0 : index
      %82 = vector.load %arg10[%c0_46, %c0_47] : memref<1x1xf32, #tpu.memory_space<vmem>>, vector<1x1xf32>
      tpu.vector_store %arg10[%c0_46, %c0_47], %81 {strides = array<i32>} : memref<1x1xf32, #tpu.memory_space<vmem>>, vector<1x1xf32>,
      %cst_48 = arith.constant 0.000000e+00 : f32
      %83 = vector.broadcast %cst_48 : f32 to vector<1x1xf32>
      %c0_49 = arith.constant 0 : index
      %c0_50 = arith.constant 0 : index
      %84 = vector.load %arg11[%c0_49, %c0_50] : memref<1x1xf32, #tpu.memory_space<vmem>>, vector<1x1xf32>
      tpu.vector_store %arg11[%c0_49, %c0_50], %83 {strides = array<i32>} : memref<1x1xf32, #tpu.memory_space<vmem>>, vector<1x1xf32>,
    } else {
    }
    %c0 = arith.constant 0 : index
    %c0_1 = arith.constant 0 : index
    %3 = vector.load %arg1[%c0, %c0_1] : memref<32x32xbf16, #tpu.memory_space<vmem>>, vector<32x32xbf16>
    %c0_2 = arith.constant 0 : index
    %c0_3 = arith.constant 0 : index
    %4 = vector.load %arg3[%c0_2, %c0_3] : memref<32x128xbf16, #tpu.memory_space<vmem>>, vector<32x128xbf16>
    %cst = arith.constant dense<0.000000e+00> : vector<32x128xf32>
    %5 = tpu.matmul %3, %4, %cst {dimension_numbers = #tpu.dot_dimension_numbers<[1], [0], [0], [1], [0, 0, 1, 1], [], []>} : vector<32x32xbf16>, vector<32x128xbf16>, vector<32x128xf32> -> vector<32x128xf32>
    %c0_4 = arith.constant 0 : index
    %c0_5 = arith.constant 0 : index
    %6 = vector.load %arg4[%c0_4, %c0_5] : memref<1x128xf32, #tpu.memory_space<vmem>>, vector<1x128xf32>
    %7 = vector.broadcast %6 : vector<1x128xf32> to vector<32x128xf32>
    %8 = arith.addf %5, %7 : vector<32x128xf32>
    %c0_6 = arith.constant 0 : index
    %c0_7 = arith.constant 0 : index
    %9 = vector.load %arg2[%c0_6, %c0_7] : memref<32x32xbf16, #tpu.memory_space<vmem>>, vector<32x32xbf16>
    %c0_8 = arith.constant 0 : index
    %c0_9 = arith.constant 0 : index
    %10 = vector.load %arg5[%c0_8, %c0_9] : memref<32x128xbf16, #tpu.memory_space<vmem>>, vector<32x128xbf16>
    %cst_10 = arith.constant dense<0.000000e+00> : vector<32x128xf32>
    %11 = tpu.matmul %9, %10, %cst_10 {dimension_numbers = #tpu.dot_dimension_numbers<[1], [0], [0], [1], [0, 0, 1, 1], [], []>} : vector<32x32xbf16>, vector<32x128xbf16>, vector<32x128xf32> -> vector<32x128xf32>
    %c0_11 = arith.constant 0 : index
    %c0_12 = arith.constant 0 : index
    %12 = vector.load %arg6[%c0_11, %c0_12] : memref<1x128xf32, #tpu.memory_space<vmem>>, vector<1x128xf32>
    %13 = vector.broadcast %12 : vector<1x128xf32> to vector<32x128xf32>
    %14 = arith.addf %11, %13 : vector<32x128xf32>
    %cst_13 = arith.constant dense<0xFF800000> : vector<32xf32>
    %15 = vector.multi_reduction <maximumf>, %8, %cst_13 [1] : vector<32x128xf32> to vector<32xf32>
    %16 = vector.shape_cast %15 : vector<32xf32> to vector<32x1xf32>
    %17 = vector.broadcast %16 : vector<32x1xf32> to vector<32x128xf32>
    %18 = arith.subf %8, %17 : vector<32x128xf32>
    %19 = math.exp %18 : vector<32x128xf32>
    %cst_14 = arith.constant dense<0.000000e+00> : vector<32xf32>
    %20 = vector.multi_reduction <add>, %19, %cst_14 [1] : vector<32x128xf32> to vector<32xf32>
    %21 = vector.shape_cast %20 : vector<32xf32> to vector<32x1xf32>
    %22 = math.log %21 : vector<32x1xf32>
    %23 = vector.broadcast %22 : vector<32x1xf32> to vector<32x128xf32>
    %24 = arith.subf %18, %23 : vector<32x128xf32>
    %cst_15 = arith.constant dense<0xFF800000> : vector<32xf32>
    %25 = vector.multi_reduction <maximumf>, %14, %cst_15 [1] : vector<32x128xf32> to vector<32xf32>
    %26 = vector.shape_cast %25 : vector<32xf32> to vector<32x1xf32>
    %27 = vector.broadcast %26 : vector<32x1xf32> to vector<32x128xf32>
    %28 = arith.subf %14, %27 : vector<32x128xf32>
    %29 = math.exp %28 : vector<32x128xf32>
    %cst_16 = arith.constant dense<0.000000e+00> : vector<32xf32>
    %30 = vector.multi_reduction <add>, %29, %cst_16 [1] : vector<32x128xf32> to vector<32xf32>
    %31 = vector.shape_cast %30 : vector<32xf32> to vector<32x1xf32>
    %32 = tpu.reciprocal %31 {approx = true} : vector<32x1xf32> -> vector<32x1xf32>
    %33 = vector.broadcast %32 : vector<32x1xf32> to vector<32x128xf32>
    %34 = arith.mulf %29, %33 : vector<32x128xf32>
    %35 = math.log %31 : vector<32x1xf32>
    %36 = vector.broadcast %35 : vector<32x1xf32> to vector<32x128xf32>
    %37 = arith.subf %28, %36 : vector<32x128xf32>
    %c0_17 = arith.constant 0 : index
    %c0_18 = arith.constant 0 : index
    %38 = vector.load %arg8[%c0_17, %c0_18] : memref<32x1xf32, #tpu.memory_space<vmem>>, vector<32x1xf32>
    %39 = arith.subf %37, %24 : vector<32x128xf32>
    %40 = arith.mulf %34, %39 : vector<32x128xf32>
    %cst_19 = arith.constant dense<0.000000e+00> : vector<32xf32>
    %41 = vector.multi_reduction <add>, %40, %cst_19 [1] : vector<32x128xf32> to vector<32xf32>
    %42 = vector.shape_cast %41 : vector<32xf32> to vector<32x1xf32>
    %43 = arith.mulf %42, %38 : vector<32x1xf32>
    %c0_20 = arith.constant 0 : index
    %c0_21 = arith.constant 0 : index
    %44 = vector.load %arg9[%c0_20, %c0_21] : memref<1x1xf32, #tpu.memory_space<vmem>>, vector<1x1xf32>
    %cst_22 = arith.constant dense<0.000000e+00> : vector<1xf32>
    %45 = vector.multi_reduction <add>, %43, %cst_22 [0] : vector<32x1xf32> to vector<1xf32>
    %46 = vector.shape_cast %45 : vector<1xf32> to vector<1x1xf32>
    %47 = arith.addf %44, %46 : vector<1x1xf32>
    %c0_23 = arith.constant 0 : index
    %c0_24 = arith.constant 0 : index
    %48 = vector.load %arg9[%c0_23, %c0_24] : memref<1x1xf32, #tpu.memory_space<vmem>>, vector<1x1xf32>
    tpu.vector_store %arg9[%c0_23, %c0_24], %47 {strides = array<i32>} : memref<1x1xf32, #tpu.memory_space<vmem>>, vector<1x1xf32>,
    %c0_25 = arith.constant 0 : index
    %c0_26 = arith.constant 0 : index
    %49 = vector.load %arg7[%c0_25, %c0_26] : memref<32x1xi32, #tpu.memory_space<vmem>>, vector<32x1xi32>
    %c-100_i32 = arith.constant -100 : i32
    %50 = vector.broadcast %c-100_i32 : i32 to vector<32x1xi32>
    %51 = arith.cmpi ne, %49, %50 : vector<32x1xi32>
    %c0_i32_27 = arith.constant 0 : i32
    %52 = vector.broadcast %c0_i32_27 : i32 to vector<32x1xi32>
    %53 = arith.select %51, %49, %52 : vector<32x1xi1>, vector<32x1xi32>
    %54 = tpu.iota {dimensions = array<i32: 1>} : vector<32x128xi32>
    %55 = vector.broadcast %53 : vector<32x1xi32> to vector<32x128xi32>
    %56 = arith.cmpi eq, %54, %55 : vector<32x128xi32>
    %cst_28 = arith.constant 0.000000e+00 : f32
    %57 = vector.broadcast %cst_28 : f32 to vector<32x128xf32>
    %58 = arith.select %56, %8, %57 : vector<32x128xi1>, vector<32x128xf32>
    %cst_29 = arith.constant dense<0.000000e+00> : vector<32xf32>
    %59 = vector.multi_reduction <add>, %58, %cst_29 [1] : vector<32x128xf32> to vector<32xf32>
    %60 = vector.shape_cast %59 : vector<32xf32> to vector<32x1xf32>
    %61 = arith.addf %16, %22 : vector<32x1xf32>
    %62 = arith.subf %60, %61 : vector<32x1xf32>
    %cst_30 = arith.constant 0.000000e+00 : f32
    %63 = vector.broadcast %cst_30 : f32 to vector<32x1xf32>
    %64 = arith.subf %63, %62 : vector<32x1xf32>
    %cst_31 = arith.constant 0.000000e+00 : f32
    %65 = vector.broadcast %cst_31 : f32 to vector<32x1xf32>
    %66 = arith.select %51, %64, %65 : vector<32x1xi1>, vector<32x1xf32>
    %c0_32 = arith.constant 0 : index
    %c0_33 = arith.constant 0 : index
    %67 = vector.load %arg10[%c0_32, %c0_33] : memref<1x1xf32, #tpu.memory_space<vmem>>, vector<1x1xf32>
    %cst_34 = arith.constant dense<0.000000e+00> : vector<1xf32>
    %68 = vector.multi_reduction <add>, %66, %cst_34 [0] : vector<32x1xf32> to vector<1xf32>
    %69 = vector.shape_cast %68 : vector<1xf32> to vector<1x1xf32>
    %70 = arith.addf %67, %69 : vector<1x1xf32>
    %c0_35 = arith.constant 0 : index
    %c0_36 = arith.constant 0 : index
    %71 = vector.load %arg10[%c0_35, %c0_36] : memref<1x1xf32, #tpu.memory_space<vmem>>, vector<1x1xf32>
    tpu.vector_store %arg10[%c0_35, %c0_36], %70 {strides = array<i32>} : memref<1x1xf32, #tpu.memory_space<vmem>>, vector<1x1xf32>,
    %c0_37 = arith.constant 0 : index
    %c0_38 = arith.constant 0 : index
    %72 = vector.load %arg11[%c0_37, %c0_38] : memref<1x1xf32, #tpu.memory_space<vmem>>, vector<1x1xf32>
    %73 = arith.extui %51 : vector<32x1xi1> to vector<32x1xi32>
    %74 = arith.sitofp %73 : vector<32x1xi32> to vector<32x1xf32>
    %cst_39 = arith.constant dense<0.000000e+00> : vector<1xf32>
    %75 = vector.multi_reduction <add>, %74, %cst_39 [0] : vector<32x1xf32> to vector<1xf32>
    %76 = vector.shape_cast %75 : vector<1xf32> to vector<1x1xf32>
    %77 = arith.addf %72, %76 : vector<1x1xf32>
    %c0_40 = arith.constant 0 : index
    %c0_41 = arith.constant 0 : index
    %78 = vector.load %arg11[%c0_40, %c0_41] : memref<1x1xf32, #tpu.memory_space<vmem>>, vector<1x1xf32>
    tpu.vector_store %arg11[%c0_40, %c0_41], %77 {strides = array<i32>} : memref<1x1xf32, #tpu.memory_space<vmem>>, vector<1x1xf32>,
    return
  }
  func.func @transform_0(%arg0: i32) -> (i32, i32) {
    %c0_i32 = arith.constant 0 : i32
    %c0_i32_0 = arith.constant 0 : i32
    return %arg0, %c0_i32 : i32, i32
  }
  func.func @transform_1(%arg0: i32) -> (i32, i32) {
    %c0_i32 = arith.constant 0 : i32
    %c0_i32_0 = arith.constant 0 : i32
    return %arg0, %c0_i32 : i32, i32
  }
  func.func @transform_2(%arg0: i32) -> (i32, i32) {
    %c0_i32 = arith.constant 0 : i32
    %c0_i32_0 = arith.constant 0 : i32
    %c0_i32_1 = arith.constant 0 : i32
    return %c0_i32, %c0_i32_0 : i32, i32
  }
  func.func @transform_3(%arg0: i32) -> (i32, i32) {
    %c0_i32 = arith.constant 0 : i32
    %c0_i32_0 = arith.constant 0 : i32
    %c0_i32_1 = arith.constant 0 : i32
    return %c0_i32, %c0_i32_0 : i32, i32
  }
  func.func @transform_4(%arg0: i32) -> (i32, i32) {
    %c0_i32 = arith.constant 0 : i32
    %c0_i32_0 = arith.constant 0 : i32
    %c0_i32_1 = arith.constant 0 : i32
    return %c0_i32, %c0_i32_0 : i32, i32
  }
  func.func @transform_5(%arg0: i32) -> (i32, i32) {
    %c0_i32 = arith.constant 0 : i32
    %c0_i32_0 = arith.constant 0 : i32
    %c0_i32_1 = arith.constant 0 : i32
    return %c0_i32, %c0_i32_0 : i32, i32
  }
  func.func @transform_6(%arg0: i32) -> (i32, i32) {
    %c0_i32 = arith.constant 0 : i32
    %c0_i32_0 = arith.constant 0 : i32
    return %arg0, %c0_i32 : i32, i32
  }
  func.func @transform_7(%arg0: i32) -> (i32, i32) {
    %c0_i32 = arith.constant 0 : i32
    %c0_i32_0 = arith.constant 0 : i32
    return %arg0, %c0_i32 : i32, i32
  }
  func.func @transform_8(%arg0: i32) -> (i32, i32) {
    %c0_i32 = arith.constant 0 : i32
    %c0_i32_0 = arith.constant 0 : i32
    %c0_i32_1 = arith.constant 0 : i32
    return %c0_i32, %c0_i32_0 : i32, i32
  }
  func.func @transform_9(%arg0: i32) -> (i32, i32) {
    %c0_i32 = arith.constant 0 : i32
    %c0_i32_0 = arith.constant 0 : i32
    %c0_i32_1 = arith.constant 0 : i32
    return %c0_i32, %c0_i32_0 : i32, i32
  }
  func.func @transform_10(%arg0: i32) -> (i32, i32) {
    %c0_i32 = arith.constant 0 : i32
    %c0_i32_0 = arith.constant 0 : i32
    %c0_i32_1 = arith.constant 0 : i32
    return %c0_i32, %c0_i32_0 : i32, i32
  }
}

</mosaic_0001>

<llo_original>
// kernel: tpu_custom_call.1
$region0: #{tpu_custom_call.1}
  #allocation0 [shape = 'u32[]', space=smem, size = 0x4, offset = 0x4, fixed_abs, tag = 'smem constant byte address 0x4 - core index']
  #allocation1 [shape = 'u32[144,128]{1,0:T(1,128)}', space=vmem, size = 0x12000, scoped, tag = 'internal scratch']
  %s0 = inlined_call_operand.vmem [shape: bf16[96,32], index: 0, kind: input, shape index: {}]
  %s1 = inlined_call_operand.vmem [shape: bf16[96,32], index: 1, kind: input, shape index: {}]
  %s2 = inlined_call_operand.vmem [shape: bf16[32,128], index: 2, kind: input, shape index: {}]
  %s3 = inlined_call_operand.vmem [shape: f32[1,128], index: 3, kind: input, shape index: {}]
  %s4 = inlined_call_operand.vmem [shape: bf16[32,128], index: 4, kind: input, shape index: {}]
  %s5 = inlined_call_operand.vmem [shape: f32[1,128], index: 5, kind: input, shape index: {}]
  %s6 = inlined_call_operand.vmem [shape: s32[96,1], index: 6, kind: input, shape index: {}]
  %s7 = inlined_call_operand.vmem [shape: f32[96,1], index: 7, kind: input, shape index: {}]
  %s8 = inlined_call_operand.hbm [shape: f32[1,1], index: 8, kind: output, shape index: {0}]
  %s9 = inlined_call_operand.hbm [shape: f32[1,1], index: 9, kind: output, shape index: {1}]
  %s10 = inlined_call_operand.hbm [shape: f32[1,1], index: 10, kind: output, shape index: {2}]
  %11 = xla_tuple %s8, %s9, %s10
  %s12 = sld [smem:[#allocation0]]
  $region85: #{tpu_custom_call.1} parent=0
    _
  %s14 = ssub.s32 1, %s12
  %s15 = scalar_select 0, %s14, %s12
  $region1: #{tpu_custom_call.1} parent=0
    #allocation2 [shape = 'u8[512]{0}', space=vmem, size = 0x400, scoped, tag = 'output window, operand 0, single buffered']
    #allocation3 [shape = 's32[2]{0}', space=sflag, size = 0x8, scoped, tag = 'scoped memory for tpu_custom_call.1']
    #allocation4 [shape = 'u8[512]{0}', space=vmem, size = 0x400, scoped, tag = 'output window, operand 1, single buffered']
    #allocation5 [shape = 's32[1]{0}', space=sflag, size = 0x4, scoped, tag = 'scoped memory for tpu_custom_call.1']
    #allocation6 [shape = 'u8[512]{0}', space=vmem, size = 0x400, scoped, tag = 'output window, operand 2, single buffered']
    %16 = vsyncpa [#allocation3], 0
    %17 = vsyncpa [#allocation5], 0
    loop: start=0, step=1, limit=5
    $region2: #{tpu_custom_call.1} parent=1 // loop_pre_header
      _
    $region3: #{tpu_custom_call.1} parent=1 // loop_header
      %s19 = sphi 0, %s23
      %p20 = scmp.ge.s32.totalorder %s19, 5
      %s29 = sphi 0, %s31
      %s32 = sphi 0, %s29
      %s33 = sphi 0, %s32
      %s49 = sphi 0, %s33
      %s55 = sphi 0, %s57
      %s58 = sphi 0, %s55
      %s59 = sphi 0, %s58
      %s75 = sphi 0, %s59
      %s79 = sphi 0, %s79
      %s81 = sphi 0, %s79
      %s82 = sphi 0, %s81
      %s96 = sphi 0, %s82
      %s100 = sphi 0, %s100
      %s102 = sphi 0, %s100
      %s103 = sphi 0, %s102
      %s117 = sphi 0, %s103
      %s121 = sphi 0, %s121
      %s123 = sphi 0, %s121
      %s124 = sphi 0, %s123
      %s138 = sphi 0, %s124
      %s142 = sphi 0, %s142
      %s144 = sphi 0, %s142
      %s145 = sphi 0, %s144
      %s159 = sphi 0, %s145
      %s165 = sphi 0, %s167
      %s168 = sphi 0, %s165
      %s169 = sphi 0, %s168
      %s185 = sphi 0, %s169
      %s191 = sphi 0, %s193
      %s194 = sphi 0, %s191
      %s195 = sphi 0, %s194
      %s211 = sphi 0, %s195
      %s215 = sphi 0, %s215
      %s217 = sphi 0, %s215
      %s218 = sphi 0, %s217
      %s232 = sphi 0, %s218
      %s236 = sphi 0, %s236
      %s238 = sphi 0, %s236
      %s239 = sphi 0, %s238
      %s253 = sphi 0, %s239
      %s257 = sphi 0, %s257
      %s259 = sphi 0, %s257
      %s260 = sphi 0, %s259
      %s274 = sphi 0, %s260
    $region4: #{tpu_custom_call.1} parent=1 // loop_header_branch
      %22 = sbr.rel (%p20) target = $region8
    $region5: #{tpu_custom_call.1} parent=1 // loop_body
      %s24 = ssub.s32 %s19, 1
      %s25 = ssub.s32 %s19, 2
      %s26 = sadd.s32 %s19, 1
      %s27 = ssub.s32 %s19, %s26
      %p28 = scmp.eq.s32.totalorder %s27, 0
      %s30 = sadd.s32 %s29, 1
      %s31 = scalar_select %p28, %s29, %s30
      %p34 = pneg %p28
      %p35 = scmp.eq.s32.totalorder %s19, 2
      %p36 = por %p34, %p35
      %p37 = scmp.ne.s32.totalorder %s29, %s32
      %p38 = scmp.eq.s32.totalorder %s19, 0
      %p39 = por %p37, %p38
      %p40 = scmp.ne.s32.totalorder %s29, %s32
      %p41 = scmp.eq.s32.totalorder %s24, 2
      %p42 = por %p40, %p41
      %p43 = scmp.ne.s32.totalorder %s32, %s33
      %p44 = scmp.eq.s32.totalorder %s24, 0
      %p45 = por %p43, %p44
      %p46 = scmp.ne.s32.totalorder %s32, %s33
      %p47 = scmp.eq.s32.totalorder %s25, 2
      %p48 = por %p46, %p47
      %p50 = scmp.ne.s32.totalorder %s33, %s49
      %p51 = scmp.eq.s32.totalorder %s25, 0
      %p52 = por %p50, %p51
      %s53 = ssub.s32 %s19, %s26
      %p54 = scmp.eq.s32.totalorder %s53, 0
      %s56 = sadd.s32 %s55, 1
      %s57 = scalar_select %p54, %s55, %s56
      %p60 = pneg %p54
      %p61 = scmp.eq.s32.totalorder %s19, 2
      %p62 = por %p60, %p61
      %p63 = scmp.ne.s32.totalorder %s55, %s58
      %p64 = scmp.eq.s32.totalorder %s19, 0
      %p65 = por %p63, %p64
      %p66 = scmp.ne.s32.totalorder %s55, %s58
      %p67 = scmp.eq.s32.totalorder %s24, 2
      %p68 = por %p66, %p67
      %p69 = scmp.ne.s32.totalorder %s58, %s59
      %p70 = scmp.eq.s32.totalorder %s24, 0
      %p71 = por %p69, %p70
      %p72 = scmp.ne.s32.totalorder %s58, %s59
      %p73 = scmp.eq.s32.totalorder %s25, 2
      %p74 = por %p72, %p73
      %p76 = scmp.ne.s32.totalorder %s59, %s75
      %p77 = scmp.eq.s32.totalorder %s25, 0
      %p78 = por %p76, %p77
      %s80 = sadd.s32 %s79, 1
      %p83 = scmp.eq.s32.totalorder %s19, 2
      %p84 = scmp.ne.s32.totalorder %s79, %s81
      %p85 = scmp.eq.s32.totalorder %s19, 0
      %p86 = por %p84, %p85
      %p87 = scmp.ne.s32.totalorder %s79, %s81
      %p88 = scmp.eq.s32.totalorder %s24, 2
      %p89 = por %p87, %p88
      %p90 = scmp.ne.s32.totalorder %s81, %s82
      %p91 = scmp.eq.s32.totalorder %s24, 0
      %p92 = por %p90, %p91
      %p93 = scmp.ne.s32.totalorder %s81, %s82
      %p94 = scmp.eq.s32.totalorder %s25, 2
      %p95 = por %p93, %p94
      %p97 = scmp.ne.s32.totalorder %s82, %s96
      %p98 = scmp.eq.s32.totalorder %s25, 0
      %p99 = por %p97, %p98
      %s101 = sadd.s32 %s100, 1
      %p104 = scmp.eq.s32.totalorder %s19, 2
      %p105 = scmp.ne.s32.totalorder %s100, %s102
      %p106 = scmp.eq.s32.totalorder %s19, 0
      %p107 = por %p105, %p106
      %p108 = scmp.ne.s32.totalorder %s100, %s102
      %p109 = scmp.eq.s32.totalorder %s24, 2
      %p110 = por %p108, %p109
      %p111 = scmp.ne.s32.totalorder %s102, %s103
      %p112 = scmp.eq.s32.totalorder %s24, 0
      %p113 = por %p111, %p112
      %p114 = scmp.ne.s32.totalorder %s102, %s103
      %p115 = scmp.eq.s32.totalorder %s25, 2
      %p116 = por %p114, %p115
      %p118 = scmp.ne.s32.totalorder %s103, %s117
      %p119 = scmp.eq.s32.totalorder %s25, 0
      %p120 = por %p118, %p119
      %s122 = sadd.s32 %s121, 1
      %p125 = scmp.eq.s32.totalorder %s19, 2
      %p126 = scmp.ne.s32.totalorder %s121, %s123
      %p127 = scmp.eq.s32.totalorder %s19, 0
      %p128 = por %p126, %p127
      %p129 = scmp.ne.s32.totalorder %s121, %s123
      %p130 = scmp.eq.s32.totalorder %s24, 2
      %p131 = por %p129, %p130
      %p132 = scmp.ne.s32.totalorder %s123, %s124
      %p133 = scmp.eq.s32.totalorder %s24, 0
      %p134 = por %p132, %p133
      %p135 = scmp.ne.s32.totalorder %s123, %s124
      %p136 = scmp.eq.s32.totalorder %s25, 2
      %p137 = por %p135, %p136
      %p139 = scmp.ne.s32.totalorder %s124, %s138
      %p140 = scmp.eq.s32.totalorder %s25, 0
      %p141 = por %p139, %p140
      %s143 = sadd.s32 %s142, 1
      %p146 = scmp.eq.s32.totalorder %s19, 2
      %p147 = scmp.ne.s32.totalorder %s142, %s144
      %p148 = scmp.eq.s32.totalorder %s19, 0
      %p149 = por %p147, %p148
      %p150 = scmp.ne.s32.totalorder %s142, %s144
      %p151 = scmp.eq.s32.totalorder %s24, 2
      %p152 = por %p150, %p151
      %p153 = scmp.ne.s32.totalorder %s144, %s145
      %p154 = scmp.eq.s32.totalorder %s24, 0
      %p155 = por %p153, %p154
      %p156 = scmp.ne.s32.totalorder %s144, %s145
      %p157 = scmp.eq.s32.totalorder %s25, 2
      %p158 = por %p156, %p157
      %p160 = scmp.ne.s32.totalorder %s145, %s159
      %p161 = scmp.eq.s32.totalorder %s25, 0
      %p162 = por %p160, %p161
      %s163 = ssub.s32 %s19, %s26
      %p164 = scmp.eq.s32.totalorder %s163, 0
      %s166 = sadd.s32 %s165, 1
      %s167 = scalar_select %p164, %s165, %s166
      %p170 = pneg %p164
      %p171 = scmp.eq.s32.totalorder %s19, 2
      %p172 = por %p170, %p171
      %p173 = scmp.ne.s32.totalorder %s165, %s168
      %p174 = scmp.eq.s32.totalorder %s19, 0
      %p175 = por %p173, %p174
      %p176 = scmp.ne.s32.totalorder %s165, %s168
      %p177 = scmp.eq.s32.totalorder %s24, 2
      %p178 = por %p176, %p177
      %p179 = scmp.ne.s32.totalorder %s168, %s169
      %p180 = scmp.eq.s32.totalorder %s24, 0
      %p181 = por %p179, %p180
      %p182 = scmp.ne.s32.totalorder %s168, %s169
      %p183 = scmp.eq.s32.totalorder %s25, 2
      %p184 = por %p182, %p183
      %p186 = scmp.ne.s32.totalorder %s169, %s185
      %p187 = scmp.eq.s32.totalorder %s25, 0
      %p188 = por %p186, %p187
      %s189 = ssub.s32 %s19, %s26
      %p190 = scmp.eq.s32.totalorder %s189, 0
      %s192 = sadd.s32 %s191, 1
      %s193 = scalar_select %p190, %s191, %s192
      %p196 = pneg %p190
      %p197 = scmp.eq.s32.totalorder %s19, 2
      %p198 = por %p196, %p197
      %p199 = scmp.ne.s32.totalorder %s191, %s194
      %p200 = scmp.eq.s32.totalorder %s19, 0
      %p201 = por %p199, %p200
      %p202 = scmp.ne.s32.totalorder %s191, %s194
      %p203 = scmp.eq.s32.totalorder %s24, 2
      %p204 = por %p202, %p203
      %p205 = scmp.ne.s32.totalorder %s194, %s195
      %p206 = scmp.eq.s32.totalorder %s24, 0
      %p207 = por %p205, %p206
      %p208 = scmp.ne.s32.totalorder %s194, %s195
      %p209 = scmp.eq.s32.totalorder %s25, 2
      %p210 = por %p208, %p209
      %p212 = scmp.ne.s32.totalorder %s195, %s211
      %p213 = scmp.eq.s32.totalorder %s25, 0
      %p214 = por %p212, %p213
      %s216 = sadd.s32 %s215, 1
      %p219 = scmp.eq.s32.totalorder %s19, 2
      %p220 = scmp.ne.s32.totalorder %s215, %s217
      %p221 = scmp.eq.s32.totalorder %s19, 0
      %p222 = por %p220, %p221
      %p223 = scmp.ne.s32.totalorder %s215, %s217
      %p224 = scmp.eq.s32.totalorder %s24, 2
      %p225 = por %p223, %p224
      %p226 = scmp.ne.s32.totalorder %s217, %s218
      %p227 = scmp.eq.s32.totalorder %s24, 0
      %p228 = por %p226, %p227
      %p229 = scmp.ne.s32.totalorder %s217, %s218
      %p230 = scmp.eq.s32.totalorder %s25, 2
      %p231 = por %p229, %p230
      %p233 = scmp.ne.s32.totalorder %s218, %s232
      %p234 = scmp.eq.s32.totalorder %s25, 0
      %p235 = por %p233, %p234
      %s237 = sadd.s32 %s236, 1
      %p240 = scmp.eq.s32.totalorder %s19, 2
      %p241 = scmp.ne.s32.totalorder %s236, %s238
      %p242 = scmp.eq.s32.totalorder %s19, 0
      %p243 = por %p241, %p242
      %p244 = scmp.ne.s32.totalorder %s236, %s238
      %p245 = scmp.eq.s32.totalorder %s24, 2
      %p246 = por %p244, %p245
      %p247 = scmp.ne.s32.totalorder %s238, %s239
      %p248 = scmp.eq.s32.totalorder %s24, 0
      %p249 = por %p247, %p248
      %p250 = scmp.ne.s32.totalorder %s238, %s239
      %p251 = scmp.eq.s32.totalorder %s25, 2
      %p252 = por %p250, %p251
      %p254 = scmp.ne.s32.totalorder %s239, %s253
      %p255 = scmp.eq.s32.totalorder %s25, 0
      %p256 = por %p254, %p255
      %s258 = sadd.s32 %s257, 1
      %p261 = scmp.eq.s32.totalorder %s19, 2
      %p262 = scmp.ne.s32.totalorder %s257, %s259
      %p263 = scmp.eq.s32.totalorder %s19, 0
      %p264 = por %p262, %p263
      %p265 = scmp.ne.s32.totalorder %s257, %s259
      %p266 = scmp.eq.s32.totalorder %s24, 2
      %p267 = por %p265, %p266
      %p268 = scmp.ne.s32.totalorder %s259, %s260
      %p269 = scmp.eq.s32.totalorder %s24, 0
      %p270 = por %p268, %p269
      %p271 = scmp.ne.s32.totalorder %s259, %s260
      %p272 = scmp.eq.s32.totalorder %s25, 2
      %p273 = por %p271, %p272
      %p275 = scmp.ne.s32.totalorder %s260, %s274
      %p276 = scmp.eq.s32.totalorder %s25, 0
      %p277 = por %p275, %p276
      %p278 = scmp.le.s32.totalorder 1, %s19
      %p279 = scmp.lt.s32.totalorder %s19, 4
      %p280 = pnand %p278, %p279
      %p281 = pneg %p280
      // Predicated region
      $region9: #{tpu_custom_call.1} parent=5 // pred_check
        _
      $region10: #{tpu_custom_call.1} parent=5 // pred_check_branch
        %283 = sbr.rel (%p280) target = $region12
      $region11: #{tpu_custom_call.1} parent=5 // pred_region
        %s284 = ssub.s32 %s19, 1
        // Predicated region
        $region13: #{tpu_custom_call.1} parent=11 // pred_check
          %p285 = pneg %p92
        $region14: #{tpu_custom_call.1} parent=11 // pred_check_branch
          %287 = sbr.rel (%p285) target = $region16
        $region15: #{tpu_custom_call.1} parent=11 // pred_region
          _
        $region16: #{tpu_custom_call.1} parent=11 // pred_fallthru
          _
        // Predicated region
        $region17: #{tpu_custom_call.1} parent=11 // pred_check
          %p288 = pneg %p113
        $region18: #{tpu_custom_call.1} parent=11 // pred_check_branch
          %290 = sbr.rel (%p288) target = $region20
        $region19: #{tpu_custom_call.1} parent=11 // pred_region
          _
        $region20: #{tpu_custom_call.1} parent=11 // pred_fallthru
          _
        // Predicated region
        $region21: #{tpu_custom_call.1} parent=11 // pred_check
          %p291 = pneg %p134
        $region22: #{tpu_custom_call.1} parent=11 // pred_check_branch
          %293 = sbr.rel (%p291) target = $region24
        $region23: #{tpu_custom_call.1} parent=11 // pred_region
          _
        $region24: #{tpu_custom_call.1} parent=11 // pred_fallthru
          _
        // Predicated region
        $region25: #{tpu_custom_call.1} parent=11 // pred_check
          %p294 = pneg %p155
        $region26: #{tpu_custom_call.1} parent=11 // pred_check_branch
          %296 = sbr.rel (%p294) target = $region28
        $region27: #{tpu_custom_call.1} parent=11 // pred_region
          _
        $region28: #{tpu_custom_call.1} parent=11 // pred_fallthru
          _
      $region12: #{tpu_custom_call.1} parent=5 // pred_fallthru
        _
      %p297 = scmp.lt.s32.totalorder %s19, 3
      // Predicated region
      $region29: #{tpu_custom_call.1} parent=5 // pred_check
        %p298 = pneg %p297
      $region30: #{tpu_custom_call.1} parent=5 // pred_check_branch
        %300 = sbr.rel (%p298) target = $region32
      $region31: #{tpu_custom_call.1} parent=5 // pred_region
        // Predicated region
        $region33: #{tpu_custom_call.1} parent=31 // pred_check
          %p301 = pneg %p39
        $region34: #{tpu_custom_call.1} parent=31 // pred_check_branch
          %303 = sbr.rel (%p301) target = $region36
        $region35: #{tpu_custom_call.1} parent=31 // pred_region
          %s304 = smul.u32 4, %s19
          %p305 = scmp.lt.s32.totalorder %s304, 11
          %s306 = scalar_select %p305, %s304, 11
          %s307 = smul.addr %s306, 4
          %s308 = scalar_lea.vmem %s0, %s307
          %s309 = smul.u32 4, %s19
        $region36: #{tpu_custom_call.1} parent=31 // pred_fallthru
          _
        // Predicated region
        $region37: #{tpu_custom_call.1} parent=31 // pred_check
          %p310 = pneg %p65
        $region38: #{tpu_custom_call.1} parent=31 // pred_check_branch
          %312 = sbr.rel (%p310) target = $region40
        $region39: #{tpu_custom_call.1} parent=31 // pred_region
          %s313 = smul.u32 4, %s19
          %p314 = scmp.lt.s32.totalorder %s313, 11
          %s315 = scalar_select %p314, %s313, 11
          %s316 = smul.addr %s315, 4
          %s317 = scalar_lea.vmem %s1, %s316
          %s318 = smul.u32 4, %s19
        $region40: #{tpu_custom_call.1} parent=31 // pred_fallthru
          _
        // Predicated region
        $region41: #{tpu_custom_call.1} parent=31 // pred_check
          %p319 = pneg %p175
        $region42: #{tpu_custom_call.1} parent=31 // pred_check_branch
          %321 = sbr.rel (%p319) target = $region44
        $region43: #{tpu_custom_call.1} parent=31 // pred_region
          %s322 = smul.u32 4, %s19
          %p323 = scmp.lt.s32.totalorder %s322, 11
          %s324 = scalar_select %p323, %s322, 11
          %s325 = smul.addr %s324, 8
          %s326 = scalar_lea.vmem %s6, %s325
          %s327 = smul.u32 4, %s19
        $region44: #{tpu_custom_call.1} parent=31 // pred_fallthru
          _
        // Predicated region
        $region45: #{tpu_custom_call.1} parent=31 // pred_check
          %p328 = pneg %p201
        $region46: #{tpu_custom_call.1} parent=31 // pred_check_branch
          %330 = sbr.rel (%p328) target = $region48
        $region47: #{tpu_custom_call.1} parent=31 // pred_region
          %s331 = smul.u32 4, %s19
          %p332 = scmp.lt.s32.totalorder %s331, 11
          %s333 = scalar_select %p332, %s331, 11
          %s334 = smul.addr %s333, 8
          %s335 = scalar_lea.vmem %s7, %s334
          %s336 = smul.u32 4, %s19
        $region48: #{tpu_custom_call.1} parent=31 // pred_fallthru
          _
      $region32: #{tpu_custom_call.1} parent=5 // pred_fallthru
        _
      %p337 = scmp.le.s32.totalorder 1, %s19
      %p338 = scmp.lt.s32.totalorder %s19, 4
      %p339 = pnand %p337, %p338
      %p340 = pneg %p339
      // Predicated region
      $region49: #{tpu_custom_call.1} parent=5 // pred_check
        _
      $region50: #{tpu_custom_call.1} parent=5 // pred_check_branch
        %342 = sbr.rel (%p339) target = $region52
      $region51: #{tpu_custom_call.1} parent=5 // pred_region
        %s343 = ssub.s32 %s19, 1
        %s344 = smul.u32 4, %s24
        %p345 = scmp.lt.s32.totalorder %s344, 11
        %s346 = scalar_select %p345, %s344, 11
        %s347 = smul.addr %s346, 4
        %s348 = scalar_lea.vmem %s0, %s347
        %p349 = pneg %p45
        %p350 = pneg %p42
        %s351 = smul.u32 4, %s24
        %p352 = scmp.lt.s32.totalorder %s351, 11
        %s353 = scalar_select %p352, %s351, 11
        %s354 = smul.addr %s353, 4
        %s355 = scalar_lea.vmem %s1, %s354
        %p356 = pneg %p71
        %p357 = pneg %p68
        %p358 = pneg %p92
        %p359 = pneg %p89
        %p360 = pneg %p113
        %p361 = pneg %p110
        %p362 = pneg %p134
        %p363 = pneg %p131
        %p364 = pneg %p155
        %p365 = pneg %p152
        %s366 = smul.u32 4, %s24
        %p367 = scmp.lt.s32.totalorder %s366, 11
        %s368 = scalar_select %p367, %s366, 11
        %s369 = smul.addr %s368, 8
        %s370 = scalar_lea.vmem %s6, %s369
        %p371 = pneg %p181
        %p372 = pneg %p178
        %s373 = smul.u32 4, %s24
        %p374 = scmp.lt.s32.totalorder %s373, 11
        %s375 = scalar_select %p374, %s373, 11
        %s376 = smul.addr %s375, 8
        %s377 = scalar_lea.vmem %s7, %s376
        %p378 = pneg %p207
        %p379 = pneg %p204
        %p380 = pneg %p228
        %p381 = pneg %p225
        %p382 = pneg %p249
        %p383 = pneg %p246
        %p384 = pneg %p270
        %p385 = pneg %p267
        %s386 = smul.u32 4, %s24
        %p387 = scmp.lt.s32.totalorder %s386, 11
        %s388 = scalar_select %p387, %s386, 11
        %s389 = smul.addr %s388, 4
        %s390 = scalar_lea.vmem %s0, %s389
        %s391 = smul.u32 4, %s24
        %s392 = smul.u32 4, %s24
        %p393 = scmp.lt.s32.totalorder %s392, 11
        %s394 = scalar_select %p393, %s392, 11
        %s395 = smul.addr %s394, 4
        %s396 = scalar_lea.vmem %s1, %s395
        %s397 = smul.u32 4, %s24
        %s398 = smul.u32 4, %s24
        %p399 = scmp.lt.s32.totalorder %s398, 11
        %s400 = scalar_select %p399, %s398, 11
        %s401 = smul.addr %s400, 8
        %s402 = scalar_lea.vmem %s6, %s401
        %s403 = smul.u32 4, %s24
        %s404 = smul.u32 4, %s24
        %p405 = scmp.lt.s32.totalorder %s404, 11
        %s406 = scalar_select %p405, %s404, 11
        %s407 = smul.addr %s406, 8
        %s408 = scalar_lea.vmem %s7, %s407
        %s409 = smul.u32 4, %s24
        %p411 = scmp.eq.s32.totalorder %s24, 0
        // Predicated region
        $region53: #{tpu_custom_call.1} parent=51 // pred_check
          %p412 = pneg %p411
        $region54: #{tpu_custom_call.1} parent=51 // pred_check_branch
          %414 = sbr.rel (%p412) target = $region56
        $region55: #{tpu_custom_call.1} parent=51 // pred_region
          %vm415 = vcmask 0
          %416 = vst.msk [vmem:[#allocation2] sm:$0x1] %vm415, 0.0
          %417 = vst.msk [vmem:[#allocation4] sm:$0x1] %vm415, 0.0
          %418 = vst.msk [vmem:[#allocation6] sm:$0x1] %vm415, 0.0
        $region56: #{tpu_custom_call.1} parent=51 // pred_fallthru
          _
        %v419 = vld [vmem:[%s390] sm:$0xf]
        %v420 = vld [vmem:[%s390 + $0x4] sm:$0xf]
        %v421 = vld [vmem:[%s390 + $0x8] sm:$0xf]
        %v422 = vld [vmem:[%s390 + $0xc] sm:$0xf]
        %v423 = vld [vmem:[%s2] sm:$0xf]
        %v424 = vld [vmem:[%s2 + $0x4] sm:$0xf]
        %v425 = vld [vmem:[%s2 + $0x8] sm:$0xf]
        %v426 = vld [vmem:[%s2 + $0xc] sm:$0xf]
        %v427 = vld [vmem:[%s3] sm:$0x1]
        %v429 = vlaneseq
        %v430 = vshrl.u32 %v429, 7
        %v431 = vsub.s32 0, %v430
        %v432 = vrot.slane %v427, %v431
        %v438 = vunpack.c.l.b16 %v419
        %v439 = vunpack.c.l.b16 %v420
        %v440 = vunpack.c.l.b16 %v421
        %v441 = vunpack.c.l.b16 %v422
        %v442 = vpack.c.b16 %v439, %v438
        %v443 = vpack.c.b16 %v441, %v440
        %v448 = vunpack.c.l.b16 %v423
        %v449 = vunpack.c.l.b16 %v424
        %v450 = vunpack.c.l.b16 %v425
        %v451 = vunpack.c.l.b16 %v426
        %v452 = vpack.c.b16 %v449, %v448
        %v453 = vpack.c.b16 %v451, %v450
        %vm456 = vcmask 261120
        %v458 = vsel %vm456, %v442, 0
        %v461 = vsel %vm456, %v443, 0
        %463 = vmatprep.subr.bf16.mxu0 0
        %464 = vmatpush1.bf16.msra.mxu0 %v452
        %465 = vmatprep.subr.bf16.mxu0 0
        %466 = vmatpush1.bf16.msra.mxu0 %v453
        %467 = vmatprep.subr.bf16.mxu0 0
        %468 = vmatpush1.bf16.msra.mxu0 0
        %469 = vmatprep.subr.bf16.mxu0 0
        %470 = vmatpush1.bf16.msra.mxu0 0
        %471 = vmatprep.subr.bf16.mxu0 0
        %472 = vmatpush1.bf16.msra.mxu0 0
        %473 = vmatprep.subr.bf16.mxu0 0
        %474 = vmatpush1.bf16.msra.mxu0 0
        %475 = vmatprep.subr.bf16.mxu0 0
        %476 = vmatpush1.bf16.msra.mxu0 0
        %477 = vmatprep.subr.bf16.mxu0 0
        %478 = vmatpush1.bf16.msra.mxu0 0
        %479 = vmatprep.subr.bf16.mxu0 0
        %480 = vmatpush1.bf16.msra.mxu0 0
        %481 = vmatprep.subr.bf16.mxu0 0
        %482 = vmatpush1.bf16.msra.mxu0 0
        %483 = vmatprep.subr.bf16.mxu0 0
        %484 = vmatpush1.bf16.msra.mxu0 0
        %485 = vmatprep.subr.bf16.mxu0 0
        %486 = vmatpush1.bf16.msra.mxu0 0
        %487 = vmatprep.subr.bf16.mxu0 0
        %488 = vmatpush1.bf16.msra.mxu0 0
        %489 = vmatprep.subr.bf16.mxu0 0
        %490 = vmatpush1.bf16.msra.mxu0 0
        %491 = vmatprep.subr.bf16.mxu0 0
        %492 = vmatpush1.bf16.msra.mxu0 0
        %493 = vmatprep.subr.bf16.mxu0 0
        %494 = vmatpush1.bf16.msra.mxu0 0
        %495 = vmatprep.mubr.bf16.mxu0 0
        %496 = vmatmul.mubr.bf16.gmra.mrb[0].mxu0 %v458
        %v497 = vpop.f32.mrb[0].mxu0
        %v498 = vadd.f32 %v432, %v497
        %v499 = vpop.f32.mrb[0].mxu0
        %v500 = vpop.f32.mrb[0].mxu0
        %v501 = vadd.f32 %v432, %v500
        %v502 = vpop.f32.mrb[0].mxu0
        %503 = vmatprep.mubr.bf16.mxu0 0
        %504 = vmatmul.mubr.bf16.gmra.mrb[0].mxu0 %v461
        %v505 = vpop.f32.mrb[0].mxu0
        %v506 = vadd.f32 %v432, %v505
        %v507 = vpop.f32.mrb[0].mxu0
        %v508 = vpop.f32.mrb[0].mxu0
        %v509 = vadd.f32 %v432, %v508
        %v510 = vpop.f32.mrb[0].mxu0
        %511 = vdwg.mxu0
        %v512 = vld [vmem:[%s396] sm:$0xf]
        %v513 = vld [vmem:[%s396 + $0x4] sm:$0xf]
        %v514 = vld [vmem:[%s396 + $0x8] sm:$0xf]
        %v515 = vld [vmem:[%s396 + $0xc] sm:$0xf]
        %v516 = vld [vmem:[%s4] sm:$0xf]
        %v517 = vld [vmem:[%s4 + $0x4] sm:$0xf]
        %v518 = vld [vmem:[%s4 + $0x8] sm:$0xf]
        %v519 = vld [vmem:[%s4 + $0xc] sm:$0xf]
        %v520 = vld [vmem:[%s5] sm:$0x1]
        %v522 = vlaneseq
        %v523 = vshrl.u32 %v522, 7
        %v524 = vsub.s32 0, %v523
        %v525 = vrot.slane %v520, %v524
        %v531 = vunpack.c.l.b16 %v512
        %v532 = vunpack.c.l.b16 %v513
        %v533 = vunpack.c.l.b16 %v514
        %v534 = vunpack.c.l.b16 %v515
        %v535 = vpack.c.b16 %v532, %v531
        %v536 = vpack.c.b16 %v534, %v533
        %v541 = vunpack.c.l.b16 %v516
        %v542 = vunpack.c.l.b16 %v517
        %v543 = vunpack.c.l.b16 %v518
        %v544 = vunpack.c.l.b16 %v519
        %v545 = vpack.c.b16 %v542, %v541
        %v546 = vpack.c.b16 %v544, %v543
        %v550 = vsel %vm456, %v535, 0
        %v553 = vsel %vm456, %v536, 0
        %555 = vmatprep.subr.bf16.mxu0 0
        %556 = vmatpush1.bf16.msra.mxu0 %v545
        %557 = vmatprep.subr.bf16.mxu0 0
        %558 = vmatpush1.bf16.msra.mxu0 %v546
        %559 = vmatprep.subr.bf16.mxu0 0
        %560 = vmatpush1.bf16.msra.mxu0 0
        %561 = vmatprep.subr.bf16.mxu0 0
        %562 = vmatpush1.bf16.msra.mxu0 0
        %563 = vmatprep.subr.bf16.mxu0 0
        %564 = vmatpush1.bf16.msra.mxu0 0
        %565 = vmatprep.subr.bf16.mxu0 0
        %566 = vmatpush1.bf16.msra.mxu0 0
        %567 = vmatprep.subr.bf16.mxu0 0
        %568 = vmatpush1.bf16.msra.mxu0 0
        %569 = vmatprep.subr.bf16.mxu0 0
        %570 = vmatpush1.bf16.msra.mxu0 0
        %571 = vmatprep.subr.bf16.mxu0 0
        %572 = vmatpush1.bf16.msra.mxu0 0
        %573 = vmatprep.subr.bf16.mxu0 0
        %574 = vmatpush1.bf16.msra.mxu0 0
        %575 = vmatprep.subr.bf16.mxu0 0
        %576 = vmatpush1.bf16.msra.mxu0 0
        %577 = vmatprep.subr.bf16.mxu0 0
        %578 = vmatpush1.bf16.msra.mxu0 0
        %579 = vmatprep.subr.bf16.mxu0 0
        %580 = vmatpush1.bf16.msra.mxu0 0
        %581 = vmatprep.subr.bf16.mxu0 0
        %582 = vmatpush1.bf16.msra.mxu0 0
        %583 = vmatprep.subr.bf16.mxu0 0
        %584 = vmatpush1.bf16.msra.mxu0 0
        %585 = vmatprep.subr.bf16.mxu0 0
        %586 = vmatpush1.bf16.msra.mxu0 0
        %587 = vmatprep.mubr.bf16.mxu0 0
        %588 = vmatmul.mubr.bf16.gmra.mrb[0].mxu0 %v550
        %v589 = vpop.f32.mrb[0].mxu0
        %v590 = vadd.f32 %v525, %v589
        %v591 = vpop.f32.mrb[0].mxu0
        %v592 = vpop.f32.mrb[0].mxu0
        %v593 = vadd.f32 %v525, %v592
        %v594 = vpop.f32.mrb[0].mxu0
        %595 = vmatprep.mubr.bf16.mxu0 0
        %596 = vmatmul.mubr.bf16.gmra.mrb[0].mxu0 %v553
        %v597 = vpop.f32.mrb[0].mxu0
        %v598 = vadd.f32 %v525, %v597
        %v599 = vpop.f32.mrb[0].mxu0
        %v600 = vpop.f32.mrb[0].mxu0
        %v601 = vadd.f32 %v525, %v600
        %v602 = vpop.f32.mrb[0].mxu0
        %603 = vdwg.mxu0
        %604 = vmax.xlane.f32.xlu0 %v498
        %v605 = vpop.xlane.xlu0 %604
        %606 = vmax.xlane.f32.xlu0 %v501
        %v607 = vpop.xlane.xlu0 %606
        %608 = vmax.xlane.f32.xlu0 %v506
        %v609 = vpop.xlane.xlu0 %608
        %610 = vmax.xlane.f32.xlu0 %v509
        %v611 = vpop.xlane.xlu0 %610
        %v612 = vsub.f32 %v498, %v605
        %v613 = vsub.f32 %v501, %v607
        %v614 = vsub.f32 %v506, %v609
        %v615 = vsub.f32 %v509, %v611
        %v616 = vmul.f32 %v612, 1.442695
        %v617 = vpow.pop %v616
        %v618 = vmul.f32 %v613, 1.442695
        %v619 = vpow.pop %v618
        %v620 = vmul.f32 %v614, 1.442695
        %v621 = vpow.pop %v620
        %v622 = vmul.f32 %v615, 1.442695
        %v623 = vpow.pop %v622
        %624 = vadd.xlane.f32.xlu0 %v617
        %v625 = vpop.xlane.xlu0 %624
        %626 = vadd.xlane.f32.xlu0 %v619
        %v627 = vpop.xlane.xlu0 %626
        %628 = vadd.xlane.f32.xlu0 %v621
        %v629 = vpop.xlane.xlu0 %628
        %630 = vadd.xlane.f32.xlu0 %v623
        %v631 = vpop.xlane.xlu0 %630
        %v632 = vlog2.pop %v625
        %v633 = vmul.f32 %v632, 0.6931472
        %v634 = vlog2.pop %v627
        %v635 = vmul.f32 %v634, 0.6931472
        %v636 = vlog2.pop %v629
        %v637 = vmul.f32 %v636, 0.6931472
        %v638 = vlog2.pop %v631
        %v639 = vmul.f32 %v638, 0.6931472
        %v640 = vsub.f32 %v612, %v633
        %v641 = vsub.f32 %v613, %v635
        %v642 = vsub.f32 %v614, %v637
        %v643 = vsub.f32 %v615, %v639
        %644 = vmax.xlane.f32.xlu0 %v590
        %v645 = vpop.xlane.xlu0 %644
        %646 = vmax.xlane.f32.xlu0 %v593
        %v647 = vpop.xlane.xlu0 %646
        %648 = vmax.xlane.f32.xlu0 %v598
        %v649 = vpop.xlane.xlu0 %648
        %650 = vmax.xlane.f32.xlu0 %v601
        %v651 = vpop.xlane.xlu0 %650
        %v652 = vsub.f32 %v590, %v645
        %v653 = vsub.f32 %v593, %v647
        %v654 = vsub.f32 %v598, %v649
        %v655 = vsub.f32 %v601, %v651
        %v656 = vmul.f32 %v652, 1.442695
        %v657 = vpow.pop %v656
        %v658 = vmul.f32 %v653, 1.442695
        %v659 = vpow.pop %v658
        %v660 = vmul.f32 %v654, 1.442695
        %v661 = vpow.pop %v660
        %v662 = vmul.f32 %v655, 1.442695
        %v663 = vpow.pop %v662
        %664 = vadd.xlane.f32.xlu0 %v657
        %v665 = vpop.xlane.xlu0 %664
        %666 = vadd.xlane.f32.xlu0 %v659
        %v667 = vpop.xlane.xlu0 %666
        %668 = vadd.xlane.f32.xlu0 %v661
        %v669 = vpop.xlane.xlu0 %668
        %670 = vadd.xlane.f32.xlu0 %v663
        %v671 = vpop.xlane.xlu0 %670
        %v672 = vrcp.pop %v665
        %v673 = vrcp.pop %v667
        %v674 = vrcp.pop %v669
        %v675 = vrcp.pop %v671
        %v676 = vmul.f32 %v657, %v672
        %v677 = vmul.f32 %v659, %v673
        %v678 = vmul.f32 %v661, %v674
        %v679 = vmul.f32 %v663, %v675
        %v680 = vlog2.pop %v665
        %v681 = vmul.f32 %v680, 0.6931472
        %v682 = vlog2.pop %v667
        %v683 = vmul.f32 %v682, 0.6931472
        %v684 = vlog2.pop %v669
        %v685 = vmul.f32 %v684, 0.6931472
        %v686 = vlog2.pop %v671
        %v687 = vmul.f32 %v686, 0.6931472
        %v688 = vsub.f32 %v652, %v681
        %v689 = vsub.f32 %v653, %v683
        %v690 = vsub.f32 %v654, %v685
        %v691 = vsub.f32 %v655, %v687
        %v692 = vld [vmem:[%s408] sm:$0xff]
        %v693 = vld [vmem:[%s408 + $0x8] sm:$0xff]
        %v694 = vld [vmem:[%s408 + $0x10] sm:$0xff]
        %v695 = vld [vmem:[%s408 + $0x18] sm:$0xff]
        %v696 = vsub.f32 %v688, %v640
        %v697 = vsub.f32 %v689, %v641
        %v698 = vsub.f32 %v690, %v642
        %v699 = vsub.f32 %v691, %v643
        %v700 = vmul.f32 %v676, %v696
        %v701 = vmul.f32 %v677, %v697
        %v702 = vmul.f32 %v678, %v698
        %v703 = vmul.f32 %v679, %v699
        %704 = vadd.xlane.f32.xlu0 %v700
        %v705 = vpop.xlane.xlu0 %704
        %706 = vadd.xlane.f32.xlu0 %v701
        %v707 = vpop.xlane.xlu0 %706
        %708 = vadd.xlane.f32.xlu0 %v702
        %v709 = vpop.xlane.xlu0 %708
        %710 = vadd.xlane.f32.xlu0 %v703
        %v711 = vpop.xlane.xlu0 %710
        %v712 = vmul.f32 %v705, %v692
        %v713 = vmul.f32 %v707, %v693
        %v714 = vmul.f32 %v709, %v694
        %v715 = vmul.f32 %v711, %v695
        %v716 = vld [vmem:[#allocation2] sm:$0x1]
        %vm717 = vcmask 7168
        %v718 = vsel %vm717, %v712, 0.0
        %v719 = vsel %vm717, %v713, 0.0
        %v720 = vadd.f32 %v718, %v719
        %v721 = vsel %vm717, %v714, 0.0
        %v722 = vadd.f32 %v720, %v721
        %v723 = vsel %vm717, %v715, 0.0
        %v724 = vadd.f32 %v722, %v723
        %v725 = vrot.slane %v724, 4
        %v726 = vadd.f32 %v724, %v725
        %v727 = vrot.slane %v726, 2
        %v728 = vadd.f32 %v726, %v727
        %v729 = vrot.slane %v728, 1
        %v730 = vadd.f32 %v728, %v729
        %v731 = vadd.f32 %v716, %v730
        %vm732 = vcmask 0
        %733 = vst.msk [vmem:[#allocation2] sm:$0x1] %vm732, %v731
        %v734 = vld [vmem:[%s402] sm:$0xff]
        %v735 = vld [vmem:[%s402 + $0x8] sm:$0xff]
        %v736 = vld [vmem:[%s402 + $0x10] sm:$0xff]
        %v737 = vld [vmem:[%s402 + $0x18] sm:$0xff]
        %vm738 = vcmp.ne.s32.totalorder %v734, 4294967196
        %vm739 = vcmp.ne.s32.totalorder %v735, 4294967196
        %vm740 = vcmp.ne.s32.totalorder %v736, 4294967196
        %vm741 = vcmp.ne.s32.totalorder %v737, 4294967196
        %v742 = vsel %vm738, %v734, 0
        %v743 = vsel %vm739, %v735, 0
        %v744 = vsel %vm740, %v736, 0
        %v745 = vsel %vm741, %v737, 0
        %v746 = vlaneseq
        %v747 = vand.u32 %v746, 127
        %748 = vset.pattern.permute.xlu0 0
        %749 = vperm.xlu0 %748, %v742
        %v750 = vpop.permute.xlu0 %749
        %751 = vset.pattern.permute.xlu0 0
        %752 = vperm.xlu0 %751, %v743
        %v753 = vpop.permute.xlu0 %752
        %754 = vset.pattern.permute.xlu0 0
        %755 = vperm.xlu0 %754, %v744
        %v756 = vpop.permute.xlu0 %755
        %757 = vset.pattern.permute.xlu0 0
        %758 = vperm.xlu0 %757, %v745
        %v759 = vpop.permute.xlu0 %758
        %vm760 = vcmp.eq.s32.totalorder %v747, %v750
        %vm761 = vcmp.eq.s32.totalorder %v747, %v753
        %vm762 = vcmp.eq.s32.totalorder %v747, %v756
        %vm763 = vcmp.eq.s32.totalorder %v747, %v759
        %v764 = vsel %vm760, %v498, 0.0
        %v765 = vsel %vm761, %v501, 0.0
        %v766 = vsel %vm762, %v506, 0.0
        %v767 = vsel %vm763, %v509, 0.0
        %768 = vadd.xlane.f32.xlu0 %v764
        %v769 = vpop.xlane.xlu0 %768
        %770 = vadd.xlane.f32.xlu0 %v765
        %v771 = vpop.xlane.xlu0 %770
        %772 = vadd.xlane.f32.xlu0 %v766
        %v773 = vpop.xlane.xlu0 %772
        %774 = vadd.xlane.f32.xlu0 %v767
        %v775 = vpop.xlane.xlu0 %774
        %v776 = vadd.f32 %v605, %v633
        %v777 = vadd.f32 %v607, %v635
        %v778 = vadd.f32 %v609, %v637
        %v779 = vadd.f32 %v611, %v639
        %v780 = vsub.f32 %v769, %v776
        %v781 = vsub.f32 %v771, %v777
        %v782 = vsub.f32 %v773, %v778
        %v783 = vsub.f32 %v775, %v779
        %v784 = vsub.f32 0.0, %v780
        %v785 = vsub.f32 0.0, %v781
        %v786 = vsub.f32 0.0, %v782
        %v787 = vsub.f32 0.0, %v783
        %v788 = vsel %vm738, %v784, 0.0
        %v789 = vsel %vm739, %v785, 0.0
        %v790 = vsel %vm740, %v786, 0.0
        %v791 = vsel %vm741, %v787, 0.0
        %v792 = vld [vmem:[#allocation4] sm:$0x1]
        %v793 = vsel %vm717, %v788, 0.0
        %v794 = vsel %vm717, %v789, 0.0
        %v795 = vadd.f32 %v793, %v794
        %v796 = vsel %vm717, %v790, 0.0
        %v797 = vadd.f32 %v795, %v796
        %v798 = vsel %vm717, %v791, 0.0
        %v799 = vadd.f32 %v797, %v798
        %v800 = vrot.slane %v799, 4
        %v801 = vadd.f32 %v799, %v800
        %v802 = vrot.slane %v801, 2
        %v803 = vadd.f32 %v801, %v802
        %v804 = vrot.slane %v803, 1
        %v805 = vadd.f32 %v803, %v804
        %v806 = vadd.f32 %v792, %v805
        %807 = vst.msk [vmem:[#allocation4] sm:$0x1] %vm732, %v806
        %v808 = vld [vmem:[#allocation6] sm:$0x1]
        %v809 = vsel %vm738, 1, 0
        %v810 = vsel %vm739, 1, 0
        %v811 = vsel %vm740, 1, 0
        %v812 = vsel %vm741, 1, 0
        %v813 = vcvt.s32.f32 %v809
        %v814 = vcvt.s32.f32 %v810
        %v815 = vcvt.s32.f32 %v811
        %v816 = vcvt.s32.f32 %v812
        %v817 = vsel %vm717, %v813, 0.0
        %v818 = vsel %vm717, %v814, 0.0
        %v819 = vadd.f32 %v817, %v818
        %v820 = vsel %vm717, %v815, 0.0
        %v821 = vadd.f32 %v819, %v820
        %v822 = vsel %vm717, %v816, 0.0
        %v823 = vadd.f32 %v821, %v822
        %v824 = vrot.slane %v823, 4
        %v825 = vadd.f32 %v823, %v824
        %v826 = vrot.slane %v825, 2
        %v827 = vadd.f32 %v825, %v826
        %v828 = vrot.slane %v827, 1
        %v829 = vadd.f32 %v827, %v828
        %v830 = vadd.f32 %v808, %v829
        %831 = vst.msk [vmem:[#allocation6] sm:$0x1] %vm732, %v830
        // Predicated region
        $region57: #{tpu_custom_call.1} parent=51 // pred_check
          %p832 = pneg %p225
        $region58: #{tpu_custom_call.1} parent=51 // pred_check_branch
          %834 = sbr.rel (%p832) target = $region60
        $region59: #{tpu_custom_call.1} parent=51 // pred_region
          %s836 = ssub.s32 16, 16
          %837 = vsyncadd [#allocation3], %s836
          %s839 = sshll.u32 [#allocation2], 4
          %s840 = int_to_ptr.vmem [resolvable:$true] %s839
          %842 = dma.vmem_to_hbm [thread:$0]  %s840, 16, %s8, [#allocation3]
        $region60: #{tpu_custom_call.1} parent=51 // pred_fallthru
          _
        // Predicated region
        $region61: #{tpu_custom_call.1} parent=51 // pred_check
          %p843 = pneg %p246
        $region62: #{tpu_custom_call.1} parent=51 // pred_check_branch
          %845 = sbr.rel (%p843) target = $region64
        $region63: #{tpu_custom_call.1} parent=51 // pred_region
          %s847 = ssub.s32 16, 16
          %848 = vsyncadd [#allocation5], %s847
          %s850 = sshll.u32 [#allocation4], 4
          %s851 = int_to_ptr.vmem [resolvable:$true] %s850
          %853 = dma.vmem_to_hbm [thread:$0]  %s851, 16, %s9, [#allocation5]
        $region64: #{tpu_custom_call.1} parent=51 // pred_fallthru
          _
        // Predicated region
        $region65: #{tpu_custom_call.1} parent=51 // pred_check
          %p854 = pneg %p267
        $region66: #{tpu_custom_call.1} parent=51 // pred_check_branch
          %856 = sbr.rel (%p854) target = $region68
        $region67: #{tpu_custom_call.1} parent=51 // pred_region
          %s858 = ssub.s32 16, 16
          %859 = vsyncadd [#allocation5], %s858
          %s861 = sshll.u32 [#allocation6], 4
          %s862 = int_to_ptr.vmem [resolvable:$true] %s861
          %864 = dma.vmem_to_hbm [thread:$0]  %s862, 16, %s10, [#allocation5]
        $region68: #{tpu_custom_call.1} parent=51 // pred_fallthru
          _
        // Predicated region
        $region69: #{tpu_custom_call.1} parent=51 // pred_check
          %p865 = pneg %p225
        $region70: #{tpu_custom_call.1} parent=51 // pred_check_branch
          %867 = sbr.rel (%p865) target = $region72
        $region71: #{tpu_custom_call.1} parent=51 // pred_region
          %868 = dma.done [#allocation3], 16
        $region72: #{tpu_custom_call.1} parent=51 // pred_fallthru
          _
        // Predicated region
        $region73: #{tpu_custom_call.1} parent=51 // pred_check
          %p869 = pneg %p246
        $region74: #{tpu_custom_call.1} parent=51 // pred_check_branch
          %871 = sbr.rel (%p869) target = $region76
        $region75: #{tpu_custom_call.1} parent=51 // pred_region
          %872 = dma.done [#allocation5], 16
        $region76: #{tpu_custom_call.1} parent=51 // pred_fallthru
          _
        // Predicated region
        $region77: #{tpu_custom_call.1} parent=51 // pred_check
          %p873 = pneg %p267
        $region78: #{tpu_custom_call.1} parent=51 // pred_check_branch
          %875 = sbr.rel (%p873) target = $region80
        $region79: #{tpu_custom_call.1} parent=51 // pred_region
          %876 = dma.done [#allocation5], 16
        $region80: #{tpu_custom_call.1} parent=51 // pred_fallthru
          _
      $region52: #{tpu_custom_call.1} parent=5 // pred_fallthru
        _
      %p877 = scmp.le.s32.totalorder 2, %s19
      // Predicated region
      $region81: #{tpu_custom_call.1} parent=5 // pred_check
        %p878 = pneg %p877
      $region82: #{tpu_custom_call.1} parent=5 // pred_check_branch
        %880 = sbr.rel (%p878) target = $region84
      $region83: #{tpu_custom_call.1} parent=5 // pred_region
        %s881 = ssub.s32 %s19, 2
      $region84: #{tpu_custom_call.1} parent=5 // pred_fallthru
        _
    $region6: #{tpu_custom_call.1} parent=1 // loop_footer
      %s23 = sadd.s32 1, %s19
    $region7: #{tpu_custom_call.1} parent=1 // loop_footer_branch
      %18 = sbr.rel target = $region3
    $region8: #{tpu_custom_call.1} parent=1 // loop_exit
      _
    %882 = vsyncpa [#allocation3], 1
    %s883 = scalar_lea.sflag [#allocation3], 1
    %884 = vsyncpa %s883, 1
    %885 = vsyncpa [#allocation5], 1

</llo_original>
